<compile_context>
chip_gen: v7x
topology: tpu7x:2x2x1
jax: 0.10.0
libtpu: 0.0.40
codegen_flags: <defaults>
</compile_context>

<pallas_src>
import functools

import jax
import jax.numpy as jnp
import numpy as np
from jax.experimental import pallas as pl
from jax.experimental.pallas import tpu as pltpu


def _freq_kernel(x_ref, fhr_ref, fhi_ref, fwbr_ref, fwbi_ref, mask_ref, o_ref,
                 *, w_first):
    """One (H, TB*W) slab of TB planes per grid step.

    fhr/fhi   : forward DFT matrix for H, real/imag, (H, H)
    fwbr/fwbi : kron(I_TB, F_W) real/imag, (TB*W, TB*W)
    mask      : ifftshifted enhancement mask / (H*W), tiled to (H, TB*W), f32
    w_first   : static; True puts the Gauss 3-mult stages on the H-side
                (small) matmuls, False on the W-side (big) matmuls.
    """
    f32 = jnp.float32
    cdt = fhr_ref.dtype                     # matmul operand dtype (f32 or bf16)

    x = x_ref[0].astype(cdt)                # (H, TBW), real input slab
    fhr = fhr_ref[...]
    fhi = fhi_ref[...]
    fwbr = fwbr_ref[...]
    fwbi = fwbi_ref[...]
    mask = mask_ref[...]                    # f32, includes 1/(H*W)

    def dot(a, b):
        return jnp.dot(a, b, preferred_element_type=f32)

    if w_first:
        # ---- Order B: 2 big + 3 small + 3 small + 2 big matmuls ----
        fhs = fhr + fhi                     # F_H re+im   (Gauss sum, small)
        fhd = fhr - fhi                     # F_H re-im   (conj Gauss sum)
        # fwd DFT along W (x real): T = x @ F_Wb
        t_re = dot(x, fwbr)
        t_im = dot(x, fwbi)
        # fwd DFT along H, complex, Gauss 3-mult: X = F_H @ T
        m1 = dot(fhr, t_re.astype(cdt))
        m2 = dot(fhi, t_im.astype(cdt))
        m3 = dot(fhs, (t_re + t_im).astype(cdt))
        xr = m1 - m2
        xi = m3 - m1 - m2
        # radial high-frequency enhancement (real mask, f32 VPU path)
        yr = xr * mask
        yi = xi * mask
        # inv DFT along H with conj(F_H), Gauss 3-mult
        n1 = dot(fhr, yr.astype(cdt))
        n2 = dot(fhi, yi.astype(cdt))
        n3 = dot(fhd, (yr + yi).astype(cdt))
        ur = n1 + n2                        # real(conj(F_H) @ Y)
        ui = n3 - n1 + n2                   # imag(conj(F_H) @ Y)
        # inv DFT along W with conj(F_W); real part only
        out = dot(ur.astype(cdt), fwbr) + dot(ui.astype(cdt), fwbi)
    else:
        # ---- Order A: 2 small + 3 big + 3 big + 2 small matmuls ----
        fwbs = fwbr + fwbi                  # kron(I, fwr + fwi)
        fwbd = fwbr - fwbi                  # kron(I, fwr - fwi)
        # fwd DFT along H (x real): T = F_H @ x
        t_re = dot(fhr, x)
        t_im = dot(fhi, x)
        # fwd DFT along W, complex, Gauss 3-mult: X = T @ F_Wb
        m1 = dot(t_re.astype(cdt), fwbr)
        m2 = dot(t_im.astype(cdt), fwbi)
        m3 = dot((t_re + t_im).astype(cdt), fwbs)
        xr = m1 - m2
        xi = m3 - m1 - m2
        yr = xr * mask
        yi = xi * mask
        # inv DFT along W with conj(F_W), Gauss 3-mult
        n1 = dot(yr.astype(cdt), fwbr)
        n2 = dot(yi.astype(cdt), fwbi)
        n3 = dot((yr + yi).astype(cdt), fwbd)
        ur = n1 + n2
        ui = n3 - n1 + n2
        # inv DFT along H with conj(F_H); real part only
        out = dot(fhr, ur.astype(cdt)) + dot(fhi, ui.astype(cdt))

    o_ref[0] = out.astype(o_ref.dtype)


def _pick_tb(n_planes, w):
    """Planes stacked per grid step along the lane axis."""
    # smallest divisor of n_planes that makes the lane dim a multiple of 128
    for d in range(1, n_planes + 1):
        if n_planes % d == 0 and (d * w) % 128 == 0:
            return d
    # fallback: largest divisor keeping the replicated F_W block modest
    best = 1
    for d in range(1, n_planes + 1):
        if n_planes % d == 0 and d * w <= 512:
            best = d
    return best


def frequency_domain_processing(x, enhancement_factor=0.5,
                                matmul_dtype=jnp.float32):
    """x: (B, C, H, W) float -> (B, C, H, W) float32.

    matmul_dtype=jnp.bfloat16 gives ~3x MXU throughput at ~1e-2 absolute error;
    the default float32 matches the reference FFT pipeline to ~1e-3.
    """
    B, C, H, W = x.shape
    n_planes = B * C
    tb = _pick_tb(n_planes, W)
    g = n_planes // tb
    tbw = tb * W

    # Put the Gauss 3-mult stages on the cheaper matmul side.
    w_first = tbw >= H

    # ---- layout plumbing: stack TB planes along the lane axis ----
    x32 = x.astype(jnp.float32)
    x_slab = (x32.reshape(g, tb, H, W)
                 .transpose(0, 2, 1, 3)
                 .reshape(g, H, tbw))

    # ---- forward DFT matrices only (inverse = conj(F)/N, folded away) ----
    kh = np.arange(H)
    kw = np.arange(W)
    fh = np.exp(-2j * np.pi * np.outer(kh, kh) / H)
    fw = np.exp(-2j * np.pi * np.outer(kw, kw) / W)
    fhr = jnp.asarray(fh.real, matmul_dtype)
    fhi = jnp.asarray(fh.imag, matmul_dtype)
    eye = np.eye(tb)
    fwbr = jnp.asarray(np.kron(eye, fw.real), matmul_dtype)
    fwbi = jnp.asarray(np.kron(eye, fw.imag), matmul_dtype)

    # ---- enhancement mask (torch meshgrid 'ij'), ifftshifted, /(H*W) folded,
    #      tiled across the TB lane segments ----
    yy, xx = np.meshgrid(np.arange(H), np.arange(W), indexing="ij")
    cy, cx = H // 2, W // 2
    dist = np.sqrt((xx - cx) ** 2 + (yy - cy) ** 2).astype(np.float32)
    mask = 1.0 + enhancement_factor * dist / dist.max()
    mask = np.fft.ifftshift(mask) / float(H * W)
    mask_t = jnp.asarray(np.tile(mask, (1, tb)), jnp.float32)      # (H, TBW)

    plane_spec = pl.BlockSpec((1, H, tbw), lambda i: (i, 0, 0))

    def const2(shape):
        return pl.BlockSpec(shape, lambda i: (0, 0))

    # Rough VMEM budget: double-buffered constants + blocks + f32 intermediates.
    itemsize = np.dtype(matmul_dtype).itemsize
    est = (2 * (2 * H * H + 2 * tbw * tbw) * itemsize   # DFT constants (x2 buf)
           + 2 * H * tbw * 4                            # mask
           + 4 * H * tbw * 4                            # in/out blocks (x2 buf)
           + 16 * H * tbw * 4)                          # live intermediates
    vmem_limit = int(min(48 * 2**20, max(est, 8 * 2**20)))   # headroom on v7x

    out_slab = pl.pallas_call(
        functools.partial(_freq_kernel, w_first=w_first),
        out_shape=jax.ShapeDtypeStruct((g, H, tbw), jnp.float32),
        grid=(g,),
        in_specs=[plane_spec,
                  const2((H, H)), const2((H, H)),          # F_H real/imag
                  const2((tbw, tbw)), const2((tbw, tbw)),  # kron(I, F_W) re/im
                  const2((H, tbw))],                       # mask
        out_specs=plane_spec,
        compiler_params=pltpu.CompilerParams(
            dimension_semantics=("parallel",),
            vmem_limit_bytes=vmem_limit),
    )(x_slab, fhr, fhi, fwbr, fwbi, mask_t)

    return (out_slab.reshape(g, H, tb, W)
                    .transpose(0, 2, 1, 3)
                    .reshape(B, C, H, W))


def _reference(x, enhancement_factor=0.5):
    # Pure-JAX reference mirroring the PyTorch module.  (torch's fftshift over
    # the batch/channel dims is a permutation undone by ifftshift and commutes
    # with the broadcast real mask, so shifting only (-2, -1) is equivalent.)
    H, W = x.shape[-2:]
    xf = jnp.fft.fft2(x)
    xf = jnp.fft.fftshift(xf, axes=(-2, -1))
    yy, xx = jnp.meshgrid(jnp.arange(H), jnp.arange(W), indexing="ij")
    cy, cx = H // 2, W // 2
    dist = jnp.sqrt(((xx - cx) ** 2 + (yy - cy) ** 2).astype(jnp.float32))
    mask = 1.0 + enhancement_factor * dist / dist.max()
    xf = xf * mask
    xf = jnp.fft.ifftshift(xf, axes=(-2, -1))
    return jnp.real(jnp.fft.ifft2(xf)).astype(jnp.float32)


if __name__ == "__main__":
    key = jax.random.PRNGKey(0)
    B, C, H, W = 2, 4, 16, 16
    x = jax.random.normal(key, (B, C, H, W), dtype=jnp.float32)

    ref = np.asarray(_reference(x, enhancement_factor=0.5))

    # Precision path (f32 matmul operands): matches the FFT reference tightly.
    out_f32 = jax.block_until_ready(
        frequency_domain_processing(x, 0.5, matmul_dtype=jnp.float32))
    np.testing.assert_allclose(np.asarray(out_f32), ref, rtol=1e-3, atol=1e-3)

    # Fast path (bf16 matmul operands, f32 accumulation): ~3x MXU throughput,
    # absolute error ~1e-2 on O(1) outputs; sanity-bound it.
    out_bf16 = jax.block_until_ready(
        frequency_domain_processing(x, 0.5, matmul_dtype=jnp.bfloat16))
    assert float(jnp.max(jnp.abs(out_bf16 - ref))) < 0.5

    print("KERNEL_OK")
</pallas_src>

<mosaic_0001>
module attributes {stable_mosaic.version = 11 : i64} {
  func.func @_freq_kernel(%arg0: i32, %arg1: memref<1x16x128xf32, #tpu.memory_space<vmem>>, %arg2: memref<16x16xf32, #tpu.memory_space<vmem>>, %arg3: memref<16x16xf32, #tpu.memory_space<vmem>>, %arg4: memref<128x128xf32, #tpu.memory_space<vmem>>, %arg5: memref<128x128xf32, #tpu.memory_space<vmem>>, %arg6: memref<16x128xf32, #tpu.memory_space<vmem>>, %arg7: memref<1x16x128xf32, #tpu.memory_space<vmem>>) attributes {dimension_semantics = [#tpu.dimension_semantics<parallel>], iteration_bounds = array<i64: 1>, scalar_prefetch = 0 : i64, scratch_operands = 0 : i64, tpu.core_type = #tpu.core_type<tc>, window_params = [{transform_indices = @transform_0, window_bounds = array<i64: 1, 16, 128>}, {pipeline_mode = #tpu.pipeline_mode<synchronous>, transform_indices = @transform_1, window_bounds = array<i64: 16, 16>}, {pipeline_mode = #tpu.pipeline_mode<synchronous>, transform_indices = @transform_2, window_bounds = array<i64: 16, 16>}, {pipeline_mode = #tpu.pipeline_mode<synchronous>, transform_indices = @transform_3, window_bounds = array<i64: 128, 128>}, {pipeline_mode = #tpu.pipeline_mode<synchronous>, transform_indices = @transform_4, window_bounds = array<i64: 128, 128>}, {pipeline_mode = #tpu.pipeline_mode<synchronous>, transform_indices = @transform_5, window_bounds = array<i64: 16, 128>}, {transform_indices = @transform_6, window_bounds = array<i64: 1, 16, 128>}]} {
    %c0 = arith.constant 0 : index
    %c0_0 = arith.constant 0 : index
    %c0_1 = arith.constant 0 : index
    %0 = vector.load %arg1[%c0, %c0_0, %c0_1] : memref<1x16x128xf32, #tpu.memory_space<vmem>>, vector<1x16x128xf32>
    %1 = vector.shape_cast %0 : vector<1x16x128xf32> to vector<16x128xf32>
    %c0_2 = arith.constant 0 : index
    %c0_3 = arith.constant 0 : index
    %2 = vector.load %arg2[%c0_2, %c0_3] : memref<16x16xf32, #tpu.memory_space<vmem>>, vector<16x16xf32>
    %c0_4 = arith.constant 0 : index
    %c0_5 = arith.constant 0 : index
    %3 = vector.load %arg3[%c0_4, %c0_5] : memref<16x16xf32, #tpu.memory_space<vmem>>, vector<16x16xf32>
    %c0_6 = arith.constant 0 : index
    %c0_7 = arith.constant 0 : index
    %4 = vector.load %arg4[%c0_6, %c0_7] : memref<128x128xf32, #tpu.memory_space<vmem>>, vector<128x128xf32>
    %c0_8 = arith.constant 0 : index
    %c0_9 = arith.constant 0 : index
    %5 = vector.load %arg5[%c0_8, %c0_9] : memref<128x128xf32, #tpu.memory_space<vmem>>, vector<128x128xf32>
    %c0_10 = arith.constant 0 : index
    %c0_11 = arith.constant 0 : index
    %6 = vector.load %arg6[%c0_10, %c0_11] : memref<16x128xf32, #tpu.memory_space<vmem>>, vector<16x128xf32>
    %7 = arith.addf %2, %3 : vector<16x16xf32>
    %8 = arith.subf %2, %3 : vector<16x16xf32>
    %cst = arith.constant dense<0.000000e+00> : vector<16x128xf32>
    %9 = tpu.matmul %1, %4, %cst {dimension_numbers = #tpu.dot_dimension_numbers<[1], [0], [0], [1], [0, 0, 1, 1], [], []>} : vector<16x128xf32>, vector<128x128xf32>, vector<16x128xf32> -> vector<16x128xf32>
    %cst_12 = arith.constant dense<0.000000e+00> : vector<16x128xf32>
    %10 = tpu.matmul %1, %5, %cst_12 {dimension_numbers = #tpu.dot_dimension_numbers<[1], [0], [0], [1], [0, 0, 1, 1], [], []>} : vector<16x128xf32>, vector<128x128xf32>, vector<16x128xf32> -> vector<16x128xf32>
    %cst_13 = arith.constant dense<0.000000e+00> : vector<16x128xf32>
    %11 = tpu.matmul %2, %9, %cst_13 {dimension_numbers = #tpu.dot_dimension_numbers<[1], [0], [0], [1], [0, 0, 1, 1], [], []>} : vector<16x16xf32>, vector<16x128xf32>, vector<16x128xf32> -> vector<16x128xf32>
    %cst_14 = arith.constant dense<0.000000e+00> : vector<16x128xf32>
    %12 = tpu.matmul %3, %10, %cst_14 {dimension_numbers = #tpu.dot_dimension_numbers<[1], [0], [0], [1], [0, 0, 1, 1], [], []>} : vector<16x16xf32>, vector<16x128xf32>, vector<16x128xf32> -> vector<16x128xf32>
    %13 = arith.addf %9, %10 : vector<16x128xf32>
    %cst_15 = arith.constant dense<0.000000e+00> : vector<16x128xf32>
    %14 = tpu.matmul %7, %13, %cst_15 {dimension_numbers = #tpu.dot_dimension_numbers<[1], [0], [0], [1], [0, 0, 1, 1], [], []>} : vector<16x16xf32>, vector<16x128xf32>, vector<16x128xf32> -> vector<16x128xf32>
    %15 = arith.subf %11, %12 : vector<16x128xf32>
    %16 = arith.subf %14, %11 : vector<16x128xf32>
    %17 = arith.subf %16, %12 : vector<16x128xf32>
    %18 = arith.mulf %15, %6 : vector<16x128xf32>
    %19 = arith.mulf %17, %6 : vector<16x128xf32>
    %cst_16 = arith.constant dense<0.000000e+00> : vector<16x128xf32>
    %20 = tpu.matmul %2, %18, %cst_16 {dimension_numbers = #tpu.dot_dimension_numbers<[1], [0], [0], [1], [0, 0, 1, 1], [], []>} : vector<16x16xf32>, vector<16x128xf32>, vector<16x128xf32> -> vector<16x128xf32>
    %cst_17 = arith.constant dense<0.000000e+00> : vector<16x128xf32>
    %21 = tpu.matmul %3, %19, %cst_17 {dimension_numbers = #tpu.dot_dimension_numbers<[1], [0], [0], [1], [0, 0, 1, 1], [], []>} : vector<16x16xf32>, vector<16x128xf32>, vector<16x128xf32> -> vector<16x128xf32>
    %22 = arith.addf %18, %19 : vector<16x128xf32>
    %cst_18 = arith.constant dense<0.000000e+00> : vector<16x128xf32>
    %23 = tpu.matmul %8, %22, %cst_18 {dimension_numbers = #tpu.dot_dimension_numbers<[1], [0], [0], [1], [0, 0, 1, 1], [], []>} : vector<16x16xf32>, vector<16x128xf32>, vector<16x128xf32> -> vector<16x128xf32>
    %24 = arith.addf %20, %21 : vector<16x128xf32>
    %25 = arith.subf %23, %20 : vector<16x128xf32>
    %26 = arith.addf %25, %21 : vector<16x128xf32>
    %cst_19 = arith.constant dense<0.000000e+00> : vector<16x128xf32>
    %27 = tpu.matmul %24, %4, %cst_19 {dimension_numbers = #tpu.dot_dimension_numbers<[1], [0], [0], [1], [0, 0, 1, 1], [], []>} : vector<16x128xf32>, vector<128x128xf32>, vector<16x128xf32> -> vector<16x128xf32>
    %cst_20 = arith.constant dense<0.000000e+00> : vector<16x128xf32>
    %28 = tpu.matmul %26, %5, %cst_20 {dimension_numbers = #tpu.dot_dimension_numbers<[1], [0], [0], [1], [0, 0, 1, 1], [], []>} : vector<16x128xf32>, vector<128x128xf32>, vector<16x128xf32> -> vector<16x128xf32>
    %29 = arith.addf %27, %28 : vector<16x128xf32>
    %c0_21 = arith.constant 0 : index
    %c0_22 = arith.constant 0 : index
    %c0_23 = arith.constant 0 : index
    %30 = vector.load %arg7[%c0_21, %c0_22, %c0_23] : memref<1x16x128xf32, #tpu.memory_space<vmem>>, vector<1x16x128xf32>
    %31 = vector.shape_cast %30 : vector<1x16x128xf32> to vector<16x128xf32>
    %32 = vector.shape_cast %29 : vector<16x128xf32> to vector<1x16x128xf32>
    tpu.vector_store %arg7[%c0_21, %c0_22, %c0_23], %32 {strides = array<i32>} : memref<1x16x128xf32, #tpu.memory_space<vmem>>, vector<1x16x128xf32>,
    return
  }
  func.func @transform_0(%arg0: i32) -> (i32, i32, i32) {
    %c0_i32 = arith.constant 0 : i32
    %c0_i32_0 = arith.constant 0 : i32
    %c0_i32_1 = arith.constant 0 : i32
    return %arg0, %c0_i32, %c0_i32_0 : i32, i32, i32
  }
  func.func @transform_1(%arg0: i32) -> (i32, i32) {
    %c0_i32 = arith.constant 0 : i32
    %c0_i32_0 = arith.constant 0 : i32
    %c0_i32_1 = arith.constant 0 : i32
    return %c0_i32, %c0_i32_0 : i32, i32
  }
  func.func @transform_2(%arg0: i32) -> (i32, i32) {
    %c0_i32 = arith.constant 0 : i32
    %c0_i32_0 = arith.constant 0 : i32
    %c0_i32_1 = arith.constant 0 : i32
    return %c0_i32, %c0_i32_0 : i32, i32
  }
  func.func @transform_3(%arg0: i32) -> (i32, i32) {
    %c0_i32 = arith.constant 0 : i32
    %c0_i32_0 = arith.constant 0 : i32
    %c0_i32_1 = arith.constant 0 : i32
    return %c0_i32, %c0_i32_0 : i32, i32
  }
  func.func @transform_4(%arg0: i32) -> (i32, i32) {
    %c0_i32 = arith.constant 0 : i32
    %c0_i32_0 = arith.constant 0 : i32
    %c0_i32_1 = arith.constant 0 : i32
    return %c0_i32, %c0_i32_0 : i32, i32
  }
  func.func @transform_5(%arg0: i32) -> (i32, i32) {
    %c0_i32 = arith.constant 0 : i32
    %c0_i32_0 = arith.constant 0 : i32
    %c0_i32_1 = arith.constant 0 : i32
    return %c0_i32, %c0_i32_0 : i32, i32
  }
  func.func @transform_6(%arg0: i32) -> (i32, i32, i32) {
    %c0_i32 = arith.constant 0 : i32
    %c0_i32_0 = arith.constant 0 : i32
    %c0_i32_1 = arith.constant 0 : i32
    return %arg0, %c0_i32, %c0_i32_0 : i32, i32, i32
  }
}

</mosaic_0001>

<llo_original>
// kernel: tpu_custom_call.1
$region0: #{tpu_custom_call.1}
  #allocation0 [shape = 'u32[]', space=smem, size = 0x4, offset = 0x4, fixed_abs, tag = 'smem constant byte address 0x4 - core index']
  #allocation1 [shape = 'u32[144,128]{1,0:T(1,128)}', space=vmem, size = 0x12000, scoped, tag = 'internal scratch']
  %s0 = inlined_call_operand.hbm [shape: f32[1,16,128], index: 0, kind: input, shape index: {}]
  %s1 = inlined_call_operand.hbm [shape: f32[16,16], index: 1, kind: input, shape index: {}]
  %s2 = inlined_call_operand.hbm [shape: f32[16,16], index: 2, kind: input, shape index: {}]
  %s3 = inlined_call_operand.hbm [shape: f32[128,128], index: 3, kind: input, shape index: {}]
  %s4 = inlined_call_operand.hbm [shape: f32[128,128], index: 4, kind: input, shape index: {}]
  %s5 = inlined_call_operand.vmem [shape: f32[16,128], index: 5, kind: input, shape index: {}]
  %s6 = inlined_call_operand.hbm [shape: f32[1,16,128], index: 6, kind: output, shape index: {}]
  %s7 = sld [smem:[#allocation0]]
  $region54: #{tpu_custom_call.1} parent=0
    _
  %s9 = ssub.s32 1, %s7
  %s10 = scalar_select 0, %s9, %s7
  $region1: #{tpu_custom_call.1} parent=0
    #allocation2 [shape = 'u8[8192]{0}', space=vmem, size = 0x2000, scoped, tag = 'input window, operand 0, single buffered']
    #allocation3 [shape = 's32[1]{0}', space=sflag, size = 0x4, scoped, tag = 'scoped memory for tpu_custom_call.1']
    #allocation4 [shape = 's32[1]{0}', space=sflag, size = 0x4, scoped, tag = 'scoped memory for tpu_custom_call.1']
    #allocation5 [shape = 'u8[8192]{0}', space=vmem, size = 0x2000, scoped, tag = 'input window, operand 1, single buffered']
    #allocation6 [shape = 's32[1]{0}', space=sflag, size = 0x4, scoped, tag = 'scoped memory for tpu_custom_call.1']
    #allocation7 [shape = 'u8[8192]{0}', space=vmem, size = 0x2000, scoped, tag = 'input window, operand 2, single buffered']
    #allocation8 [shape = 'u8[65536]{0}', space=vmem, size = 0x10000, scoped, tag = 'input window, operand 3, single buffered']
    #allocation9 [shape = 's32[1]{0}', space=sflag, size = 0x4, scoped, tag = 'scoped memory for tpu_custom_call.1']
    #allocation10 [shape = 'u8[65536]{0}', space=vmem, size = 0x10000, scoped, tag = 'input window, operand 4, single buffered']
    #allocation11 [shape = 'u8[8192]{0}', space=vmem, size = 0x2000, scoped, tag = 'output window, operand 0, single buffered']
    %11 = vsyncpa [#allocation3], 0
    %12 = vsyncpa [#allocation6], 0
    %13 = vsyncpa [#allocation9], 0
    %14 = vsyncpa [#allocation4], 0
    // Predicated region
    $region2: #{tpu_custom_call.1} parent=1 // pred_check
      _
    $region3: #{tpu_custom_call.1} parent=1 // pred_check_branch
      %16 = sbr.rel (0) target = $region5
    $region4: #{tpu_custom_call.1} parent=1 // pred_region
      %s18 = ssub.s32 256, 256
      %19 = vsyncadd [#allocation3], %s18
      %s20 = sshll.u32 [#allocation2], 4
      %s21 = int_to_ptr.vmem [resolvable:$true] %s20
      %26 = dma.hbm_to_vmem [thread:$0]  %s0, 256, %s21, [#allocation3], 128, 128, 8
    $region5: #{tpu_custom_call.1} parent=1 // pred_fallthru
      _
    // Predicated region
    $region6: #{tpu_custom_call.1} parent=1 // pred_check
      _
    $region7: #{tpu_custom_call.1} parent=1 // pred_check_branch
      %28 = sbr.rel (0) target = $region9
    $region8: #{tpu_custom_call.1} parent=1 // pred_region
      %s30 = ssub.s32 256, 256
      %31 = vsyncadd [#allocation6], %s30
      %s32 = sshll.u32 [#allocation5], 4
      %s33 = int_to_ptr.vmem [resolvable:$true] %s32
      %38 = dma.hbm_to_vmem [thread:$0]  %s1, 256, %s33, [#allocation6], 128, 128, 8
    $region9: #{tpu_custom_call.1} parent=1 // pred_fallthru
      _
    // Predicated region
    $region10: #{tpu_custom_call.1} parent=1 // pred_check
      _
    $region11: #{tpu_custom_call.1} parent=1 // pred_check_branch
      %40 = sbr.rel (0) target = $region13
    $region12: #{tpu_custom_call.1} parent=1 // pred_region
      %s42 = ssub.s32 256, 256
      %43 = vsyncadd [#allocation6], %s42
      %s44 = sshll.u32 [#allocation7], 4
      %s45 = int_to_ptr.vmem [resolvable:$true] %s44
      %50 = dma.hbm_to_vmem [thread:$0]  %s2, 256, %s45, [#allocation6], 128, 128, 8
    $region13: #{tpu_custom_call.1} parent=1 // pred_fallthru
      _
    // Predicated region
    $region14: #{tpu_custom_call.1} parent=1 // pred_check
      _
    $region15: #{tpu_custom_call.1} parent=1 // pred_check_branch
      %52 = sbr.rel (0) target = $region17
    $region16: #{tpu_custom_call.1} parent=1 // pred_region
      %s54 = ssub.s32 2048, 2048
      %55 = vsyncadd [#allocation9], %s54
      %s56 = sshll.u32 [#allocation8], 4
      %s57 = int_to_ptr.vmem [resolvable:$true] %s56
      %62 = dma.hbm_to_vmem [thread:$0]  %s3, 2048, %s57, [#allocation9], 128, 128, 8
    $region17: #{tpu_custom_call.1} parent=1 // pred_fallthru
      _
    // Predicated region
    $region18: #{tpu_custom_call.1} parent=1 // pred_check
      _
    $region19: #{tpu_custom_call.1} parent=1 // pred_check_branch
      %64 = sbr.rel (0) target = $region21
    $region20: #{tpu_custom_call.1} parent=1 // pred_region
      %s66 = ssub.s32 2048, 2048
      %67 = vsyncadd [#allocation9], %s66
      %s68 = sshll.u32 [#allocation10], 4
      %s69 = int_to_ptr.vmem [resolvable:$true] %s68
      %74 = dma.hbm_to_vmem [thread:$0]  %s4, 2048, %s69, [#allocation9], 128, 128, 8
    $region21: #{tpu_custom_call.1} parent=1 // pred_fallthru
      _
    // Predicated region
    $region22: #{tpu_custom_call.1} parent=1 // pred_check
      _
    $region23: #{tpu_custom_call.1} parent=1 // pred_check_branch
      %76 = sbr.rel (0) target = $region25
    $region24: #{tpu_custom_call.1} parent=1 // pred_region
      _
    $region25: #{tpu_custom_call.1} parent=1 // pred_fallthru
      _
    // Predicated region
    $region26: #{tpu_custom_call.1} parent=1 // pred_check
      _
    $region27: #{tpu_custom_call.1} parent=1 // pred_check_branch
      %78 = sbr.rel (0) target = $region29
    $region28: #{tpu_custom_call.1} parent=1 // pred_region
      %79 = dma.done [#allocation3], 256
    $region29: #{tpu_custom_call.1} parent=1 // pred_fallthru
      _
    // Predicated region
    $region30: #{tpu_custom_call.1} parent=1 // pred_check
      _
    $region31: #{tpu_custom_call.1} parent=1 // pred_check_branch
      %81 = sbr.rel (0) target = $region33
    $region32: #{tpu_custom_call.1} parent=1 // pred_region
      %82 = dma.done [#allocation6], 256
    $region33: #{tpu_custom_call.1} parent=1 // pred_fallthru
      _
    // Predicated region
    $region34: #{tpu_custom_call.1} parent=1 // pred_check
      _
    $region35: #{tpu_custom_call.1} parent=1 // pred_check_branch
      %84 = sbr.rel (0) target = $region37
    $region36: #{tpu_custom_call.1} parent=1 // pred_region
      %85 = dma.done [#allocation6], 256
    $region37: #{tpu_custom_call.1} parent=1 // pred_fallthru
      _
    // Predicated region
    $region38: #{tpu_custom_call.1} parent=1 // pred_check
      _
    $region39: #{tpu_custom_call.1} parent=1 // pred_check_branch
      %87 = sbr.rel (0) target = $region41
    $region40: #{tpu_custom_call.1} parent=1 // pred_region
      %88 = dma.done [#allocation9], 2048
    $region41: #{tpu_custom_call.1} parent=1 // pred_fallthru
      _
    // Predicated region
    $region42: #{tpu_custom_call.1} parent=1 // pred_check
      _
    $region43: #{tpu_custom_call.1} parent=1 // pred_check_branch
      %90 = sbr.rel (0) target = $region45
    $region44: #{tpu_custom_call.1} parent=1 // pred_region
      %91 = dma.done [#allocation9], 2048
    $region45: #{tpu_custom_call.1} parent=1 // pred_fallthru
      _
    %v92 = vld [vmem:[#allocation2] sm:$0xff]
    %v93 = vld [vmem:[#allocation2 + $0x8] sm:$0xff]
    %v94 = vld [vmem:[#allocation5] sm:$0xff]
    %v95 = vld [vmem:[#allocation5 + $0x8] sm:$0xff]
    %v96 = vld [vmem:[#allocation7] sm:$0xff]
    %v97 = vld [vmem:[#allocation7 + $0x8] sm:$0xff]
    %v98 = vld [vmem:[#allocation8] sm:$0xff]
    %v99 = vld [vmem:[#allocation8 + $0x8] sm:$0xff]
    %v100 = vld [vmem:[#allocation8 + $0x10] sm:$0xff]
    %v101 = vld [vmem:[#allocation8 + $0x18] sm:$0xff]
    %v102 = vld [vmem:[#allocation8 + $0x20] sm:$0xff]
    %v103 = vld [vmem:[#allocation8 + $0x28] sm:$0xff]
    %v104 = vld [vmem:[#allocation8 + $0x30] sm:$0xff]
    %v105 = vld [vmem:[#allocation8 + $0x38] sm:$0xff]
    %v106 = vld [vmem:[#allocation8 + $0x40] sm:$0xff]
    %v107 = vld [vmem:[#allocation8 + $0x48] sm:$0xff]
    %v108 = vld [vmem:[#allocation8 + $0x50] sm:$0xff]
    %v109 = vld [vmem:[#allocation8 + $0x58] sm:$0xff]
    %v110 = vld [vmem:[#allocation8 + $0x60] sm:$0xff]
    %v111 = vld [vmem:[#allocation8 + $0x68] sm:$0xff]
    %v112 = vld [vmem:[#allocation8 + $0x70] sm:$0xff]
    %v113 = vld [vmem:[#allocation8 + $0x78] sm:$0xff]
    %v114 = vld [vmem:[#allocation10] sm:$0xff]
    %v115 = vld [vmem:[#allocation10 + $0x8] sm:$0xff]
    %v116 = vld [vmem:[#allocation10 + $0x10] sm:$0xff]
    %v117 = vld [vmem:[#allocation10 + $0x18] sm:$0xff]
    %v118 = vld [vmem:[#allocation10 + $0x20] sm:$0xff]
    %v119 = vld [vmem:[#allocation10 + $0x28] sm:$0xff]
    %v120 = vld [vmem:[#allocation10 + $0x30] sm:$0xff]
    %v121 = vld [vmem:[#allocation10 + $0x38] sm:$0xff]
    %v122 = vld [vmem:[#allocation10 + $0x40] sm:$0xff]
    %v123 = vld [vmem:[#allocation10 + $0x48] sm:$0xff]
    %v124 = vld [vmem:[#allocation10 + $0x50] sm:$0xff]
    %v125 = vld [vmem:[#allocation10 + $0x58] sm:$0xff]
    %v126 = vld [vmem:[#allocation10 + $0x60] sm:$0xff]
    %v127 = vld [vmem:[#allocation10 + $0x68] sm:$0xff]
    %v128 = vld [vmem:[#allocation10 + $0x70] sm:$0xff]
    %v129 = vld [vmem:[#allocation10 + $0x78] sm:$0xff]
    %v130 = vld [vmem:[%s5] sm:$0xff]
    %v131 = vld [vmem:[%s5 + $0x8] sm:$0xff]
    %v132 = vadd.f32 %v94, %v96
    %v133 = vadd.f32 %v95, %v97
    %v134 = vsub.f32 %v94, %v96
    %v135 = vsub.f32 %v95, %v97
    %136 = vmatprep.subr.mxu0 0.0
    %137 = vmatpush1.msra.mxu0 %v98
    %138 = vmatprep.subr.mxu0 0.0
    %139 = vmatpush1.msra.mxu0 %v99
    %140 = vmatprep.subr.mxu0 0.0
    %141 = vmatpush1.msra.mxu0 %v100
    %142 = vmatprep.subr.mxu0 0.0
    %143 = vmatpush1.msra.mxu0 %v101
    %144 = vmatprep.subr.mxu0 0.0
    %145 = vmatpush1.msra.mxu0 %v102
    %146 = vmatprep.subr.mxu0 0.0
    %147 = vmatpush1.msra.mxu0 %v103
    %148 = vmatprep.subr.mxu0 0.0
    %149 = vmatpush1.msra.mxu0 %v104
    %150 = vmatprep.subr.mxu0 0.0
    %151 = vmatpush1.msra.mxu0 %v105
    %152 = vmatprep.subr.mxu0 0.0
    %153 = vmatpush1.msra.mxu0 %v106
    %154 = vmatprep.subr.mxu0 0.0
    %155 = vmatpush1.msra.mxu0 %v107
    %156 = vmatprep.subr.mxu0 0.0
    %157 = vmatpush1.msra.mxu0 %v108
    %158 = vmatprep.subr.mxu0 0.0
    %159 = vmatpush1.msra.mxu0 %v109
    %160 = vmatprep.subr.mxu0 0.0
    %161 = vmatpush1.msra.mxu0 %v110
    %162 = vmatprep.subr.mxu0 0.0
    %163 = vmatpush1.msra.mxu0 %v111
    %164 = vmatprep.subr.mxu0 0.0
    %165 = vmatpush1.msra.mxu0 %v112
    %166 = vmatprep.subr.mxu0 0.0
    %167 = vmatpush1.msra.mxu0 %v113
    %168 = vmatprep.subr.mxu0 0.0
    %169 = vmatpush1.msra.mxu0 0.0
    %170 = vmatprep.subr.mxu0 0.0
    %171 = vmatpush1.msra.mxu0 0.0
    %172 = vmatprep.subr.mxu0 0.0
    %173 = vmatpush1.msra.mxu0 0.0
    %174 = vmatprep.subr.mxu0 0.0
    %175 = vmatpush1.msra.mxu0 0.0
    %176 = vmatprep.subr.mxu0 0.0
    %177 = vmatpush1.msra.mxu0 0.0
    %178 = vmatprep.subr.mxu0 0.0
    %179 = vmatpush1.msra.mxu0 0.0
    %180 = vmatprep.subr.mxu0 0.0
    %181 = vmatpush1.msra.mxu0 0.0
    %182 = vmatprep.subr.mxu0 0.0
    %183 = vmatpush1.msra.mxu0 0.0
    %184 = vmatprep.subr.mxu0 0.0
    %185 = vmatpush1.msra.mxu0 0.0
    %186 = vmatprep.subr.mxu0 0.0
    %187 = vmatpush1.msra.mxu0 0.0
    %188 = vmatprep.subr.mxu0 0.0
    %189 = vmatpush1.msra.mxu0 0.0
    %190 = vmatprep.subr.mxu0 0.0
    %191 = vmatpush1.msra.mxu0 0.0
    %192 = vmatprep.subr.mxu0 0.0
    %193 = vmatpush1.msra.mxu0 0.0
    %194 = vmatprep.subr.mxu0 0.0
    %195 = vmatpush1.msra.mxu0 0.0
    %196 = vmatprep.subr.mxu0 0.0
    %197 = vmatpush1.msra.mxu0 0.0
    %198 = vmatprep.subr.mxu0 0.0
    %199 = vmatpush1.msra.mxu0 0.0
    %200 = vmatprep.mubr.f32.mxu0 0.0
    %201 = vmatmul.mubr.f32.gmra.mrb[0].mxu0 %v92
    %v202 = vpop.f32.mrb[0].mxu0
    %v203 = vadd.f32 0.0, %v202
    %v204 = vpop.f32.mrb[0].mxu0
    %205 = vmatprep.mubr.f32.mxu0 0.0
    %206 = vmatmul.mubr.f32.gmra.mrb[0].mxu0 %v93
    %v207 = vpop.f32.mrb[0].mxu0
    %v208 = vadd.f32 0.0, %v207
    %v209 = vpop.f32.mrb[0].mxu0
    %210 = vdwg.mxu0
    %211 = vmatprep.subr.mxu0 0.0
    %212 = vmatpush1.msra.mxu0 %v114
    %213 = vmatprep.subr.mxu0 0.0
    %214 = vmatpush1.msra.mxu0 %v115
    %215 = vmatprep.subr.mxu0 0.0
    %216 = vmatpush1.msra.mxu0 %v116
    %217 = vmatprep.subr.mxu0 0.0
    %218 = vmatpush1.msra.mxu0 %v117
    %219 = vmatprep.subr.mxu0 0.0
    %220 = vmatpush1.msra.mxu0 %v118
    %221 = vmatprep.subr.mxu0 0.0
    %222 = vmatpush1.msra.mxu0 %v119
    %223 = vmatprep.subr.mxu0 0.0
    %224 = vmatpush1.msra.mxu0 %v120
    %225 = vmatprep.subr.mxu0 0.0
    %226 = vmatpush1.msra.mxu0 %v121
    %227 = vmatprep.subr.mxu0 0.0
    %228 = vmatpush1.msra.mxu0 %v122
    %229 = vmatprep.subr.mxu0 0.0
    %230 = vmatpush1.msra.mxu0 %v123
    %231 = vmatprep.subr.mxu0 0.0
    %232 = vmatpush1.msra.mxu0 %v124
    %233 = vmatprep.subr.mxu0 0.0
    %234 = vmatpush1.msra.mxu0 %v125
    %235 = vmatprep.subr.mxu0 0.0
    %236 = vmatpush1.msra.mxu0 %v126
    %237 = vmatprep.subr.mxu0 0.0
    %238 = vmatpush1.msra.mxu0 %v127
    %239 = vmatprep.subr.mxu0 0.0
    %240 = vmatpush1.msra.mxu0 %v128
    %241 = vmatprep.subr.mxu0 0.0
    %242 = vmatpush1.msra.mxu0 %v129
    %243 = vmatprep.subr.mxu0 0.0
    %244 = vmatpush1.msra.mxu0 0.0
    %245 = vmatprep.subr.mxu0 0.0
    %246 = vmatpush1.msra.mxu0 0.0
    %247 = vmatprep.subr.mxu0 0.0
    %248 = vmatpush1.msra.mxu0 0.0
    %249 = vmatprep.subr.mxu0 0.0
    %250 = vmatpush1.msra.mxu0 0.0
    %251 = vmatprep.subr.mxu0 0.0
    %252 = vmatpush1.msra.mxu0 0.0
    %253 = vmatprep.subr.mxu0 0.0
    %254 = vmatpush1.msra.mxu0 0.0
    %255 = vmatprep.subr.mxu0 0.0
    %256 = vmatpush1.msra.mxu0 0.0
    %257 = vmatprep.subr.mxu0 0.0
    %258 = vmatpush1.msra.mxu0 0.0
    %259 = vmatprep.subr.mxu0 0.0
    %260 = vmatpush1.msra.mxu0 0.0
    %261 = vmatprep.subr.mxu0 0.0
    %262 = vmatpush1.msra.mxu0 0.0
    %263 = vmatprep.subr.mxu0 0.0
    %264 = vmatpush1.msra.mxu0 0.0
    %265 = vmatprep.subr.mxu0 0.0
    %266 = vmatpush1.msra.mxu0 0.0
    %267 = vmatprep.subr.mxu0 0.0
    %268 = vmatpush1.msra.mxu0 0.0
    %269 = vmatprep.subr.mxu0 0.0
    %270 = vmatpush1.msra.mxu0 0.0
    %271 = vmatprep.subr.mxu0 0.0
    %272 = vmatpush1.msra.mxu0 0.0
    %273 = vmatprep.subr.mxu0 0.0
    %274 = vmatpush1.msra.mxu0 0.0
    %275 = vmatprep.mubr.f32.mxu0 0.0
    %276 = vmatmul.mubr.f32.gmra.mrb[0].mxu0 %v92
    %v277 = vpop.f32.mrb[0].mxu0
    %v278 = vadd.f32 0.0, %v277
    %v279 = vpop.f32.mrb[0].mxu0
    %280 = vmatprep.mubr.f32.mxu0 0.0
    %281 = vmatmul.mubr.f32.gmra.mrb[0].mxu0 %v93
    %v282 = vpop.f32.mrb[0].mxu0
    %v283 = vadd.f32 0.0, %v282
    %v284 = vpop.f32.mrb[0].mxu0
    %285 = vdwg.mxu0
    %vm286 = vcmask 130048
    %v288 = vsel %vm286, %v94, 0
    %v291 = vsel %vm286, %v95, 0
    %293 = vmatprep.subr.mxu0 0.0
    %294 = vmatpush1.msra.mxu0 %v203
    %295 = vmatprep.subr.mxu0 0.0
    %296 = vmatpush1.msra.mxu0 %v208
    %297 = vmatprep.subr.mxu0 0.0
    %298 = vmatpush1.msra.mxu0 0.0
    %299 = vmatprep.subr.mxu0 0.0
    %300 = vmatpush1.msra.mxu0 0.0
    %301 = vmatprep.subr.mxu0 0.0
    %302 = vmatpush1.msra.mxu0 0.0
    %303 = vmatprep.subr.mxu0 0.0
    %304 = vmatpush1.msra.mxu0 0.0
    %305 = vmatprep.subr.mxu0 0.0
    %306 = vmatpush1.msra.mxu0 0.0
    %307 = vmatprep.subr.mxu0 0.0
    %308 = vmatpush1.msra.mxu0 0.0
    %309 = vmatprep.subr.mxu0 0.0
    %310 = vmatpush1.msra.mxu0 0.0
    %311 = vmatprep.subr.mxu0 0.0
    %312 = vmatpush1.msra.mxu0 0.0
    %313 = vmatprep.subr.mxu0 0.0
    %314 = vmatpush1.msra.mxu0 0.0
    %315 = vmatprep.subr.mxu0 0.0
    %316 = vmatpush1.msra.mxu0 0.0
    %317 = vmatprep.subr.mxu0 0.0
    %318 = vmatpush1.msra.mxu0 0.0
    %319 = vmatprep.subr.mxu0 0.0
    %320 = vmatpush1.msra.mxu0 0.0
    %321 = vmatprep.subr.mxu0 0.0
    %322 = vmatpush1.msra.mxu0 0.0
    %323 = vmatprep.subr.mxu0 0.0
    %324 = vmatpush1.msra.mxu0 0.0
    %325 = vmatprep.subr.mxu0 0.0
    %326 = vmatpush1.msra.mxu0 0.0
    %327 = vmatprep.subr.mxu0 0.0
    %328 = vmatpush1.msra.mxu0 0.0
    %329 = vmatprep.subr.mxu0 0.0
    %330 = vmatpush1.msra.mxu0 0.0
    %331 = vmatprep.subr.mxu0 0.0
    %332 = vmatpush1.msra.mxu0 0.0
    %333 = vmatprep.subr.mxu0 0.0
    %334 = vmatpush1.msra.mxu0 0.0
    %335 = vmatprep.subr.mxu0 0.0
    %336 = vmatpush1.msra.mxu0 0.0
    %337 = vmatprep.subr.mxu0 0.0
    %338 = vmatpush1.msra.mxu0 0.0
    %339 = vmatprep.subr.mxu0 0.0
    %340 = vmatpush1.msra.mxu0 0.0
    %341 = vmatprep.subr.mxu0 0.0
    %342 = vmatpush1.msra.mxu0 0.0
    %343 = vmatprep.subr.mxu0 0.0
    %344 = vmatpush1.msra.mxu0 0.0
    %345 = vmatprep.subr.mxu0 0.0
    %346 = vmatpush1.msra.mxu0 0.0
    %347 = vmatprep.subr.mxu0 0.0
    %348 = vmatpush1.msra.mxu0 0.0
    %349 = vmatprep.subr.mxu0 0.0
    %350 = vmatpush1.msra.mxu0 0.0
    %351 = vmatprep.subr.mxu0 0.0
    %352 = vmatpush1.msra.mxu0 0.0
    %353 = vmatprep.subr.mxu0 0.0
    %354 = vmatpush1.msra.mxu0 0.0
    %355 = vmatprep.subr.mxu0 0.0
    %356 = vmatpush1.msra.mxu0 0.0
    %357 = vmatprep.mubr.f32.mxu0 0.0
    %358 = vmatmul.mubr.f32.gmra.mrb[0].mxu0 %v288
    %v359 = vpop.f32.mrb[0].mxu0
    %v360 = vadd.f32 0.0, %v359
    %v361 = vpop.f32.mrb[0].mxu0
    %362 = vmatprep.mubr.f32.mxu0 0.0
    %363 = vmatmul.mubr.f32.gmra.mrb[0].mxu0 %v291
    %v364 = vpop.f32.mrb[0].mxu0
    %v365 = vadd.f32 0.0, %v364
    %v366 = vpop.f32.mrb[0].mxu0
    %367 = vdwg.mxu0
    %v369 = vsel %vm286, %v96, 0
    %v372 = vsel %vm286, %v97, 0
    %374 = vmatprep.subr.mxu0 0.0
    %375 = vmatpush1.msra.mxu0 %v278
    %376 = vmatprep.subr.mxu0 0.0
    %377 = vmatpush1.msra.mxu0 %v283
    %378 = vmatprep.subr.mxu0 0.0
    %379 = vmatpush1.msra.mxu0 0.0
    %380 = vmatprep.subr.mxu0 0.0
    %381 = vmatpush1.msra.mxu0 0.0
    %382 = vmatprep.subr.mxu0 0.0
    %383 = vmatpush1.msra.mxu0 0.0
    %384 = vmatprep.subr.mxu0 0.0
    %385 = vmatpush1.msra.mxu0 0.0
    %386 = vmatprep.subr.mxu0 0.0
    %387 = vmatpush1.msra.mxu0 0.0
    %388 = vmatprep.subr.mxu0 0.0
    %389 = vmatpush1.msra.mxu0 0.0
    %390 = vmatprep.subr.mxu0 0.0
    %391 = vmatpush1.msra.mxu0 0.0
    %392 = vmatprep.subr.mxu0 0.0
    %393 = vmatpush1.msra.mxu0 0.0
    %394 = vmatprep.subr.mxu0 0.0
    %395 = vmatpush1.msra.mxu0 0.0
    %396 = vmatprep.subr.mxu0 0.0
    %397 = vmatpush1.msra.mxu0 0.0
    %398 = vmatprep.subr.mxu0 0.0
    %399 = vmatpush1.msra.mxu0 0.0
    %400 = vmatprep.subr.mxu0 0.0
    %401 = vmatpush1.msra.mxu0 0.0
    %402 = vmatprep.subr.mxu0 0.0
    %403 = vmatpush1.msra.mxu0 0.0
    %404 = vmatprep.subr.mxu0 0.0
    %405 = vmatpush1.msra.mxu0 0.0
    %406 = vmatprep.subr.mxu0 0.0
    %407 = vmatpush1.msra.mxu0 0.0
    %408 = vmatprep.subr.mxu0 0.0
    %409 = vmatpush1.msra.mxu0 0.0
    %410 = vmatprep.subr.mxu0 0.0
    %411 = vmatpush1.msra.mxu0 0.0
    %412 = vmatprep.subr.mxu0 0.0
    %413 = vmatpush1.msra.mxu0 0.0
    %414 = vmatprep.subr.mxu0 0.0
    %415 = vmatpush1.msra.mxu0 0.0
    %416 = vmatprep.subr.mxu0 0.0
    %417 = vmatpush1.msra.mxu0 0.0
    %418 = vmatprep.subr.mxu0 0.0
    %419 = vmatpush1.msra.mxu0 0.0
    %420 = vmatprep.subr.mxu0 0.0
    %421 = vmatpush1.msra.mxu0 0.0
    %422 = vmatprep.subr.mxu0 0.0
    %423 = vmatpush1.msra.mxu0 0.0
    %424 = vmatprep.subr.mxu0 0.0
    %425 = vmatpush1.msra.mxu0 0.0
    %426 = vmatprep.subr.mxu0 0.0
    %427 = vmatpush1.msra.mxu0 0.0
    %428 = vmatprep.subr.mxu0 0.0
    %429 = vmatpush1.msra.mxu0 0.0
    %430 = vmatprep.subr.mxu0 0.0
    %431 = vmatpush1.msra.mxu0 0.0
    %432 = vmatprep.subr.mxu0 0.0
    %433 = vmatpush1.msra.mxu0 0.0
    %434 = vmatprep.subr.mxu0 0.0
    %435 = vmatpush1.msra.mxu0 0.0
    %436 = vmatprep.subr.mxu0 0.0
    %437 = vmatpush1.msra.mxu0 0.0
    %438 = vmatprep.mubr.f32.mxu0 0.0
    %439 = vmatmul.mubr.f32.gmra.mrb[0].mxu0 %v369
    %v440 = vpop.f32.mrb[0].mxu0
    %v441 = vadd.f32 0.0, %v440
    %v442 = vpop.f32.mrb[0].mxu0
    %443 = vmatprep.mubr.f32.mxu0 0.0
    %444 = vmatmul.mubr.f32.gmra.mrb[0].mxu0 %v372
    %v445 = vpop.f32.mrb[0].mxu0
    %v446 = vadd.f32 0.0, %v445
    %v447 = vpop.f32.mrb[0].mxu0
    %448 = vdwg.mxu0
    %v449 = vadd.f32 %v203, %v278
    %v450 = vadd.f32 %v208, %v283
    %v452 = vsel %vm286, %v132, 0
    %v455 = vsel %vm286, %v133, 0
    %457 = vmatprep.subr.mxu0 0.0
    %458 = vmatpush1.msra.mxu0 %v449
    %459 = vmatprep.subr.mxu0 0.0
    %460 = vmatpush1.msra.mxu0 %v450
    %461 = vmatprep.subr.mxu0 0.0
    %462 = vmatpush1.msra.mxu0 0.0
    %463 = vmatprep.subr.mxu0 0.0
    %464 = vmatpush1.msra.mxu0 0.0
    %465 = vmatprep.subr.mxu0 0.0
    %466 = vmatpush1.msra.mxu0 0.0
    %467 = vmatprep.subr.mxu0 0.0
    %468 = vmatpush1.msra.mxu0 0.0
    %469 = vmatprep.subr.mxu0 0.0
    %470 = vmatpush1.msra.mxu0 0.0
    %471 = vmatprep.subr.mxu0 0.0
    %472 = vmatpush1.msra.mxu0 0.0
    %473 = vmatprep.subr.mxu0 0.0
    %474 = vmatpush1.msra.mxu0 0.0
    %475 = vmatprep.subr.mxu0 0.0
    %476 = vmatpush1.msra.mxu0 0.0
    %477 = vmatprep.subr.mxu0 0.0
    %478 = vmatpush1.msra.mxu0 0.0
    %479 = vmatprep.subr.mxu0 0.0
    %480 = vmatpush1.msra.mxu0 0.0
    %481 = vmatprep.subr.mxu0 0.0
    %482 = vmatpush1.msra.mxu0 0.0
    %483 = vmatprep.subr.mxu0 0.0
    %484 = vmatpush1.msra.mxu0 0.0
    %485 = vmatprep.subr.mxu0 0.0
    %486 = vmatpush1.msra.mxu0 0.0
    %487 = vmatprep.subr.mxu0 0.0
    %488 = vmatpush1.msra.mxu0 0.0
    %489 = vmatprep.subr.mxu0 0.0
    %490 = vmatpush1.msra.mxu0 0.0
    %491 = vmatprep.subr.mxu0 0.0
    %492 = vmatpush1.msra.mxu0 0.0
    %493 = vmatprep.subr.mxu0 0.0
    %494 = vmatpush1.msra.mxu0 0.0
    %495 = vmatprep.subr.mxu0 0.0
    %496 = vmatpush1.msra.mxu0 0.0
    %497 = vmatprep.subr.mxu0 0.0
    %498 = vmatpush1.msra.mxu0 0.0
    %499 = vmatprep.subr.mxu0 0.0
    %500 = vmatpush1.msra.mxu0 0.0
    %501 = vmatprep.subr.mxu0 0.0
    %502 = vmatpush1.msra.mxu0 0.0
    %503 = vmatprep.subr.mxu0 0.0
    %504 = vmatpush1.msra.mxu0 0.0
    %505 = vmatprep.subr.mxu0 0.0
    %506 = vmatpush1.msra.mxu0 0.0
    %507 = vmatprep.subr.mxu0 0.0
    %508 = vmatpush1.msra.mxu0 0.0
    %509 = vmatprep.subr.mxu0 0.0
    %510 = vmatpush1.msra.mxu0 0.0
    %511 = vmatprep.subr.mxu0 0.0
    %512 = vmatpush1.msra.mxu0 0.0
    %513 = vmatprep.subr.mxu0 0.0
    %514 = vmatpush1.msra.mxu0 0.0
    %515 = vmatprep.subr.mxu0 0.0
    %516 = vmatpush1.msra.mxu0 0.0
    %517 = vmatprep.subr.mxu0 0.0
    %518 = vmatpush1.msra.mxu0 0.0
    %519 = vmatprep.subr.mxu0 0.0
    %520 = vmatpush1.msra.mxu0 0.0
    %521 = vmatprep.mubr.f32.mxu0 0.0
    %522 = vmatmul.mubr.f32.gmra.mrb[0].mxu0 %v452
    %v523 = vpop.f32.mrb[0].mxu0
    %v524 = vadd.f32 0.0, %v523
    %v525 = vpop.f32.mrb[0].mxu0
    %526 = vmatprep.mubr.f32.mxu0 0.0
    %527 = vmatmul.mubr.f32.gmra.mrb[0].mxu0 %v455
    %v528 = vpop.f32.mrb[0].mxu0
    %v529 = vadd.f32 0.0, %v528
    %v530 = vpop.f32.mrb[0].mxu0
    %531 = vdwg.mxu0
    %v532 = vsub.f32 %v360, %v441
    %v533 = vsub.f32 %v365, %v446
    %v534 = vsub.f32 %v524, %v360
    %v535 = vsub.f32 %v529, %v365
    %v536 = vsub.f32 %v534, %v441
    %v537 = vsub.f32 %v535, %v446
    %v538 = vmul.f32 %v532, %v130
    %v539 = vmul.f32 %v533, %v131
    %v540 = vmul.f32 %v536, %v130
    %v541 = vmul.f32 %v537, %v131
    %542 = vmatprep.subr.mxu0 0.0
    %543 = vmatpush1.msra.mxu0 %v538
    %544 = vmatprep.subr.mxu0 0.0
    %545 = vmatpush1.msra.mxu0 %v539
    %546 = vmatprep.subr.mxu0 0.0
    %547 = vmatpush1.msra.mxu0 0.0
    %548 = vmatprep.subr.mxu0 0.0
    %549 = vmatpush1.msra.mxu0 0.0
    %550 = vmatprep.subr.mxu0 0.0
    %551 = vmatpush1.msra.mxu0 0.0
    %552 = vmatprep.subr.mxu0 0.0
    %553 = vmatpush1.msra.mxu0 0.0
    %554 = vmatprep.subr.mxu0 0.0
    %555 = vmatpush1.msra.mxu0 0.0
    %556 = vmatprep.subr.mxu0 0.0
    %557 = vmatpush1.msra.mxu0 0.0
    %558 = vmatprep.subr.mxu0 0.0
    %559 = vmatpush1.msra.mxu0 0.0
    %560 = vmatprep.subr.mxu0 0.0
    %561 = vmatpush1.msra.mxu0 0.0
    %562 = vmatprep.subr.mxu0 0.0
    %563 = vmatpush1.msra.mxu0 0.0
    %564 = vmatprep.subr.mxu0 0.0
    %565 = vmatpush1.msra.mxu0 0.0
    %566 = vmatprep.subr.mxu0 0.0
    %567 = vmatpush1.msra.mxu0 0.0
    %568 = vmatprep.subr.mxu0 0.0
    %569 = vmatpush1.msra.mxu0 0.0
    %570 = vmatprep.subr.mxu0 0.0
    %571 = vmatpush1.msra.mxu0 0.0
    %572 = vmatprep.subr.mxu0 0.0
    %573 = vmatpush1.msra.mxu0 0.0
    %574 = vmatprep.subr.mxu0 0.0
    %575 = vmatpush1.msra.mxu0 0.0
    %576 = vmatprep.subr.mxu0 0.0
    %577 = vmatpush1.msra.mxu0 0.0
    %578 = vmatprep.subr.mxu0 0.0
    %579 = vmatpush1.msra.mxu0 0.0
    %580 = vmatprep.subr.mxu0 0.0
    %581 = vmatpush1.msra.mxu0 0.0
    %582 = vmatprep.subr.mxu0 0.0
    %583 = vmatpush1.msra.mxu0 0.0
    %584 = vmatprep.subr.mxu0 0.0
    %585 = vmatpush1.msra.mxu0 0.0
    %586 = vmatprep.subr.mxu0 0.0
    %587 = vmatpush1.msra.mxu0 0.0
    %588 = vmatprep.subr.mxu0 0.0
    %589 = vmatpush1.msra.mxu0 0.0
    %590 = vmatprep.subr.mxu0 0.0
    %591 = vmatpush1.msra.mxu0 0.0
    %592 = vmatprep.subr.mxu0 0.0
    %593 = vmatpush1.msra.mxu0 0.0
    %594 = vmatprep.subr.mxu0 0.0
    %595 = vmatpush1.msra.mxu0 0.0
    %596 = vmatprep.subr.mxu0 0.0
    %597 = vmatpush1.msra.mxu0 0.0
    %598 = vmatprep.subr.mxu0 0.0
    %599 = vmatpush1.msra.mxu0 0.0
    %600 = vmatprep.subr.mxu0 0.0
    %601 = vmatpush1.msra.mxu0 0.0
    %602 = vmatprep.subr.mxu0 0.0
    %603 = vmatpush1.msra.mxu0 0.0
    %604 = vmatprep.subr.mxu0 0.0
    %605 = vmatpush1.msra.mxu0 0.0
    %606 = vmatprep.mubr.f32.mxu0 0.0
    %607 = vmatmul.mubr.f32.gmra.mrb[0].mxu0 %v288
    %v608 = vpop.f32.mrb[0].mxu0
    %v609 = vadd.f32 0.0, %v608
    %v610 = vpop.f32.mrb[0].mxu0
    %611 = vmatprep.mubr.f32.mxu0 0.0
    %612 = vmatmul.mubr.f32.gmra.mrb[0].mxu0 %v291
    %v613 = vpop.f32.mrb[0].mxu0
    %v614 = vadd.f32 0.0, %v613
    %v615 = vpop.f32.mrb[0].mxu0
    %616 = vdwg.mxu0
    %617 = vmatprep.subr.mxu0 0.0
    %618 = vmatpush1.msra.mxu0 %v540
    %619 = vmatprep.subr.mxu0 0.0
    %620 = vmatpush1.msra.mxu0 %v541
    %621 = vmatprep.subr.mxu0 0.0
    %622 = vmatpush1.msra.mxu0 0.0
    %623 = vmatprep.subr.mxu0 0.0
    %624 = vmatpush1.msra.mxu0 0.0
    %625 = vmatprep.subr.mxu0 0.0
    %626 = vmatpush1.msra.mxu0 0.0
    %627 = vmatprep.subr.mxu0 0.0
    %628 = vmatpush1.msra.mxu0 0.0
    %629 = vmatprep.subr.mxu0 0.0
    %630 = vmatpush1.msra.mxu0 0.0
    %631 = vmatprep.subr.mxu0 0.0
    %632 = vmatpush1.msra.mxu0 0.0
    %633 = vmatprep.subr.mxu0 0.0
    %634 = vmatpush1.msra.mxu0 0.0
    %635 = vmatprep.subr.mxu0 0.0
    %636 = vmatpush1.msra.mxu0 0.0
    %637 = vmatprep.subr.mxu0 0.0
    %638 = vmatpush1.msra.mxu0 0.0
    %639 = vmatprep.subr.mxu0 0.0
    %640 = vmatpush1.msra.mxu0 0.0
    %641 = vmatprep.subr.mxu0 0.0
    %642 = vmatpush1.msra.mxu0 0.0
    %643 = vmatprep.subr.mxu0 0.0
    %644 = vmatpush1.msra.mxu0 0.0
    %645 = vmatprep.subr.mxu0 0.0
    %646 = vmatpush1.msra.mxu0 0.0
    %647 = vmatprep.subr.mxu0 0.0
    %648 = vmatpush1.msra.mxu0 0.0
    %649 = vmatprep.subr.mxu0 0.0
    %650 = vmatpush1.msra.mxu0 0.0
    %651 = vmatprep.subr.mxu0 0.0
    %652 = vmatpush1.msra.mxu0 0.0
    %653 = vmatprep.subr.mxu0 0.0
    %654 = vmatpush1.msra.mxu0 0.0
    %655 = vmatprep.subr.mxu0 0.0
    %656 = vmatpush1.msra.mxu0 0.0
    %657 = vmatprep.subr.mxu0 0.0
    %658 = vmatpush1.msra.mxu0 0.0
    %659 = vmatprep.subr.mxu0 0.0
    %660 = vmatpush1.msra.mxu0 0.0
    %661 = vmatprep.subr.mxu0 0.0
    %662 = vmatpush1.msra.mxu0 0.0
    %663 = vmatprep.subr.mxu0 0.0
    %664 = vmatpush1.msra.mxu0 0.0
    %665 = vmatprep.subr.mxu0 0.0
    %666 = vmatpush1.msra.mxu0 0.0
    %667 = vmatprep.subr.mxu0 0.0
    %668 = vmatpush1.msra.mxu0 0.0
    %669 = vmatprep.subr.mxu0 0.0
    %670 = vmatpush1.msra.mxu0 0.0
    %671 = vmatprep.subr.mxu0 0.0
    %672 = vmatpush1.msra.mxu0 0.0
    %673 = vmatprep.subr.mxu0 0.0
    %674 = vmatpush1.msra.mxu0 0.0
    %675 = vmatprep.subr.mxu0 0.0
    %676 = vmatpush1.msra.mxu0 0.0
    %677 = vmatprep.subr.mxu0 0.0
    %678 = vmatpush1.msra.mxu0 0.0
    %679 = vmatprep.subr.mxu0 0.0
    %680 = vmatpush1.msra.mxu0 0.0
    %681 = vmatprep.mubr.f32.mxu0 0.0
    %682 = vmatmul.mubr.f32.gmra.mrb[0].mxu0 %v369
    %v683 = vpop.f32.mrb[0].mxu0
    %v684 = vadd.f32 0.0, %v683
    %v685 = vpop.f32.mrb[0].mxu0
    %686 = vmatprep.mubr.f32.mxu0 0.0
    %687 = vmatmul.mubr.f32.gmra.mrb[0].mxu0 %v372
    %v688 = vpop.f32.mrb[0].mxu0
    %v689 = vadd.f32 0.0, %v688
    %v690 = vpop.f32.mrb[0].mxu0
    %691 = vdwg.mxu0
    %v692 = vadd.f32 %v538, %v540
    %v693 = vadd.f32 %v539, %v541
    %v695 = vsel %vm286, %v134, 0
    %v698 = vsel %vm286, %v135, 0
    %700 = vmatprep.subr.mxu0 0.0
    %701 = vmatpush1.msra.mxu0 %v692
    %702 = vmatprep.subr.mxu0 0.0
    %703 = vmatpush1.msra.mxu0 %v693
    %704 = vmatprep.subr.mxu0 0.0
    %705 = vmatpush1.msra.mxu0 0.0
    %706 = vmatprep.subr.mxu0 0.0
    %707 = vmatpush1.msra.mxu0 0.0
    %708 = vmatprep.subr.mxu0 0.0
    %709 = vmatpush1.msra.mxu0 0.0
    %710 = vmatprep.subr.mxu0 0.0
    %711 = vmatpush1.msra.mxu0 0.0
    %712 = vmatprep.subr.mxu0 0.0
    %713 = vmatpush1.msra.mxu0 0.0
    %714 = vmatprep.subr.mxu0 0.0
    %715 = vmatpush1.msra.mxu0 0.0
    %716 = vmatprep.subr.mxu0 0.0
    %717 = vmatpush1.msra.mxu0 0.0
    %718 = vmatprep.subr.mxu0 0.0
    %719 = vmatpush1.msra.mxu0 0.0
    %720 = vmatprep.subr.mxu0 0.0
    %721 = vmatpush1.msra.mxu0 0.0
    %722 = vmatprep.subr.mxu0 0.0
    %723 = vmatpush1.msra.mxu0 0.0
    %724 = vmatprep.subr.mxu0 0.0
    %725 = vmatpush1.msra.mxu0 0.0
    %726 = vmatprep.subr.mxu0 0.0
    %727 = vmatpush1.msra.mxu0 0.0
    %728 = vmatprep.subr.mxu0 0.0
    %729 = vmatpush1.msra.mxu0 0.0
    %730 = vmatprep.subr.mxu0 0.0
    %731 = vmatpush1.msra.mxu0 0.0
    %732 = vmatprep.subr.mxu0 0.0
    %733 = vmatpush1.msra.mxu0 0.0
    %734 = vmatprep.subr.mxu0 0.0
    %735 = vmatpush1.msra.mxu0 0.0
    %736 = vmatprep.subr.mxu0 0.0
    %737 = vmatpush1.msra.mxu0 0.0
    %738 = vmatprep.subr.mxu0 0.0
    %739 = vmatpush1.msra.mxu0 0.0
    %740 = vmatprep.subr.mxu0 0.0
    %741 = vmatpush1.msra.mxu0 0.0
    %742 = vmatprep.subr.mxu0 0.0
    %743 = vmatpush1.msra.mxu0 0.0
    %744 = vmatprep.subr.mxu0 0.0
    %745 = vmatpush1.msra.mxu0 0.0
    %746 = vmatprep.subr.mxu0 0.0
    %747 = vmatpush1.msra.mxu0 0.0
    %748 = vmatprep.subr.mxu0 0.0
    %749 = vmatpush1.msra.mxu0 0.0
    %750 = vmatprep.subr.mxu0 0.0
    %751 = vmatpush1.msra.mxu0 0.0
    %752 = vmatprep.subr.mxu0 0.0
    %753 = vmatpush1.msra.mxu0 0.0
    %754 = vmatprep.subr.mxu0 0.0
    %755 = vmatpush1.msra.mxu0 0.0
    %756 = vmatprep.subr.mxu0 0.0
    %757 = vmatpush1.msra.mxu0 0.0
    %758 = vmatprep.subr.mxu0 0.0
    %759 = vmatpush1.msra.mxu0 0.0
    %760 = vmatprep.subr.mxu0 0.0
    %761 = vmatpush1.msra.mxu0 0.0
    %762 = vmatprep.subr.mxu0 0.0
    %763 = vmatpush1.msra.mxu0 0.0
    %764 = vmatprep.mubr.f32.mxu0 0.0
    %765 = vmatmul.mubr.f32.gmra.mrb[0].mxu0 %v695
    %v766 = vpop.f32.mrb[0].mxu0
    %v767 = vadd.f32 0.0, %v766
    %v768 = vpop.f32.mrb[0].mxu0
    %769 = vmatprep.mubr.f32.mxu0 0.0
    %770 = vmatmul.mubr.f32.gmra.mrb[0].mxu0 %v698
    %v771 = vpop.f32.mrb[0].mxu0
    %v772 = vadd.f32 0.0, %v771
    %v773 = vpop.f32.mrb[0].mxu0
    %774 = vdwg.mxu0
    %v775 = vadd.f32 %v609, %v684
    %v776 = vadd.f32 %v614, %v689
    %v777 = vsub.f32 %v767, %v609
    %v778 = vsub.f32 %v772, %v614
    %v779 = vadd.f32 %v777, %v684
    %v780 = vadd.f32 %v778, %v689
    %781 = vmatprep.subr.mxu0 0.0
    %782 = vmatpush1.msra.mxu0 %v114
    %783 = vmatprep.subr.mxu0 0.0
    %784 = vmatpush1.msra.mxu0 %v115
    %785 = vmatprep.subr.mxu0 0.0
    %786 = vmatpush1.msra.mxu0 %v116
    %787 = vmatprep.subr.mxu0 0.0
    %788 = vmatpush1.msra.mxu0 %v117
    %789 = vmatprep.subr.mxu0 0.0
    %790 = vmatpush1.msra.mxu0 %v118
    %791 = vmatprep.subr.mxu0 0.0
    %792 = vmatpush1.msra.mxu0 %v119
    %793 = vmatprep.subr.mxu0 0.0
    %794 = vmatpush1.msra.mxu0 %v120
    %795 = vmatprep.subr.mxu0 0.0
    %796 = vmatpush1.msra.mxu0 %v121
    %797 = vmatprep.subr.mxu0 0.0
    %798 = vmatpush1.msra.mxu0 %v122
    %799 = vmatprep.subr.mxu0 0.0
    %800 = vmatpush1.msra.mxu0 %v123
    %801 = vmatprep.subr.mxu0 0.0
    %802 = vmatpush1.msra.mxu0 %v124
    %803 = vmatprep.subr.mxu0 0.0
    %804 = vmatpush1.msra.mxu0 %v125
    %805 = vmatprep.subr.mxu0 0.0
    %806 = vmatpush1.msra.mxu0 %v126
    %807 = vmatprep.subr.mxu0 0.0
    %808 = vmatpush1.msra.mxu0 %v127
    %809 = vmatprep.subr.mxu0 0.0
    %810 = vmatpush1.msra.mxu0 %v128
    %811 = vmatprep.subr.mxu0 0.0
    %812 = vmatpush1.msra.mxu0 %v129
    %813 = vmatprep.subr.mxu0 0.0
    %814 = vmatpush1.msra.mxu0 0.0
    %815 = vmatprep.subr.mxu0 0.0
    %816 = vmatpush1.msra.mxu0 0.0
    %817 = vmatprep.subr.mxu0 0.0
    %818 = vmatpush1.msra.mxu0 0.0
    %819 = vmatprep.subr.mxu0 0.0
    %820 = vmatpush1.msra.mxu0 0.0
    %821 = vmatprep.subr.mxu0 0.0
    %822 = vmatpush1.msra.mxu0 0.0
    %823 = vmatprep.subr.mxu0 0.0
    %824 = vmatpush1.msra.mxu0 0.0
    %825 = vmatprep.subr.mxu0 0.0
    %826 = vmatpush1.msra.mxu0 0.0
    %827 = vmatprep.subr.mxu0 0.0
    %828 = vmatpush1.msra.mxu0 0.0
    %829 = vmatprep.subr.mxu0 0.0
    %830 = vmatpush1.msra.mxu0 0.0
    %831 = vmatprep.subr.mxu0 0.0
    %832 = vmatpush1.msra.mxu0 0.0
    %833 = vmatprep.subr.mxu0 0.0
    %834 = vmatpush1.msra.mxu0 0.0
    %835 = vmatprep.subr.mxu0 0.0
    %836 = vmatpush1.msra.mxu0 0.0
    %837 = vmatprep.subr.mxu0 0.0
    %838 = vmatpush1.msra.mxu0 0.0
    %839 = vmatprep.subr.mxu0 0.0
    %840 = vmatpush1.msra.mxu0 0.0
    %841 = vmatprep.subr.mxu0 0.0
    %842 = vmatpush1.msra.mxu0 0.0
    %843 = vmatprep.subr.mxu0 0.0
    %844 = vmatpush1.msra.mxu0 0.0
    %845 = vmatprep.mubr.f32.mxu0 0.0
    %846 = vmatmul.mubr.f32.gmra.mrb[0].mxu0 %v779
    %v847 = vpop.f32.mrb[0].mxu0
    %v848 = vadd.f32 0.0, %v847
    %v849 = vpop.f32.mrb[0].mxu0
    %850 = vmatprep.mubr.f32.mxu0 0.0
    %851 = vmatmul.mubr.f32.gmra.mrb[0].mxu0 %v780
    %v852 = vpop.f32.mrb[0].mxu0
    %v853 = vadd.f32 0.0, %v852
    %v854 = vpop.f32.mrb[0].mxu0
    %855 = vdwg.mxu0
    %856 = vmatprep.subr.mxu0 0.0
    %857 = vmatpush1.msra.mxu0 %v98
    %858 = vmatprep.subr.mxu0 0.0
    %859 = vmatpush1.msra.mxu0 %v99
    %860 = vmatprep.subr.mxu0 0.0
    %861 = vmatpush1.msra.mxu0 %v100
    %862 = vmatprep.subr.mxu0 0.0
    %863 = vmatpush1.msra.mxu0 %v101
    %864 = vmatprep.subr.mxu0 0.0
    %865 = vmatpush1.msra.mxu0 %v102
    %866 = vmatprep.subr.mxu0 0.0
    %867 = vmatpush1.msra.mxu0 %v103
    %868 = vmatprep.subr.mxu0 0.0
    %869 = vmatpush1.msra.mxu0 %v104
    %870 = vmatprep.subr.mxu0 0.0
    %871 = vmatpush1.msra.mxu0 %v105
    %872 = vmatprep.subr.mxu0 0.0
    %873 = vmatpush1.msra.mxu0 %v106
    %874 = vmatprep.subr.mxu0 0.0
    %875 = vmatpush1.msra.mxu0 %v107
    %876 = vmatprep.subr.mxu0 0.0
    %877 = vmatpush1.msra.mxu0 %v108
    %878 = vmatprep.subr.mxu0 0.0
    %879 = vmatpush1.msra.mxu0 %v109
    %880 = vmatprep.subr.mxu0 0.0
    %881 = vmatpush1.msra.mxu0 %v110
    %882 = vmatprep.subr.mxu0 0.0
    %883 = vmatpush1.msra.mxu0 %v111
    %884 = vmatprep.subr.mxu0 0.0
    %885 = vmatpush1.msra.mxu0 %v112
    %886 = vmatprep.subr.mxu0 0.0
    %887 = vmatpush1.msra.mxu0 %v113
    %888 = vmatprep.subr.mxu0 0.0
    %889 = vmatpush1.msra.mxu0 0.0
    %890 = vmatprep.subr.mxu0 0.0
    %891 = vmatpush1.msra.mxu0 0.0
    %892 = vmatprep.subr.mxu0 0.0
    %893 = vmatpush1.msra.mxu0 0.0
    %894 = vmatprep.subr.mxu0 0.0
    %895 = vmatpush1.msra.mxu0 0.0
    %896 = vmatprep.subr.mxu0 0.0
    %897 = vmatpush1.msra.mxu0 0.0
    %898 = vmatprep.subr.mxu0 0.0
    %899 = vmatpush1.msra.mxu0 0.0
    %900 = vmatprep.subr.mxu0 0.0
    %901 = vmatpush1.msra.mxu0 0.0
    %902 = vmatprep.subr.mxu0 0.0
    %903 = vmatpush1.msra.mxu0 0.0
    %904 = vmatprep.subr.mxu0 0.0
    %905 = vmatpush1.msra.mxu0 0.0
    %906 = vmatprep.subr.mxu0 0.0
    %907 = vmatpush1.msra.mxu0 0.0
    %908 = vmatprep.subr.mxu0 0.0
    %909 = vmatpush1.msra.mxu0 0.0
    %910 = vmatprep.subr.mxu0 0.0
    %911 = vmatpush1.msra.mxu0 0.0
    %912 = vmatprep.subr.mxu0 0.0
    %913 = vmatpush1.msra.mxu0 0.0
    %914 = vmatprep.subr.mxu0 0.0
    %915 = vmatpush1.msra.mxu0 0.0
    %916 = vmatprep.subr.mxu0 0.0
    %917 = vmatpush1.msra.mxu0 0.0
    %918 = vmatprep.subr.mxu0 0.0
    %919 = vmatpush1.msra.mxu0 0.0
    %920 = vmatprep.mubr.f32.mxu0 0.0
    %921 = vmatmul.mubr.f32.gmra.mrb[0].mxu0 %v775
    %v922 = vpop.f32.mrb[0].mxu0
    %v923 = vadd.f32 %v848, %v922
    %v924 = vpop.f32.mrb[0].mxu0
    %925 = vmatprep.mubr.f32.mxu0 0.0
    %926 = vmatmul.mubr.f32.gmra.mrb[0].mxu0 %v776
    %v927 = vpop.f32.mrb[0].mxu0
    %v928 = vadd.f32 %v853, %v927
    %v929 = vpop.f32.mrb[0].mxu0
    %930 = vdwg.mxu0
    %931 = vst [vmem:[#allocation11] sm:$0xff] %v923
    %932 = vst [vmem:[#allocation11 + $0x8] sm:$0xff] %v928
    // Predicated region
    $region46: #{tpu_custom_call.1} parent=1 // pred_check
      _
    $region47: #{tpu_custom_call.1} parent=1 // pred_check_branch
      %934 = sbr.rel (0) target = $region49
    $region48: #{tpu_custom_call.1} parent=1 // pred_region
      %s936 = ssub.s32 256, 256
      %937 = vsyncadd [#allocation4], %s936
      %s938 = sshll.u32 [#allocation11], 4
      %s939 = int_to_ptr.vmem [resolvable:$true] %s938
      %944 = dma.vmem_to_hbm [thread:$0]  %s939, 256, %s6, [#allocation4], 128, 128, 8
    $region49: #{tpu_custom_call.1} parent=1 // pred_fallthru
      _
    // Predicated region
    $region50: #{tpu_custom_call.1} parent=1 // pred_check
      _
    $region51: #{tpu_custom_call.1} parent=1 // pred_check_branch
      %946 = sbr.rel (0) target = $region53
    $region52: #{tpu_custom_call.1} parent=1 // pred_region
      %947 = dma.done [#allocation4], 256
    $region53: #{tpu_custom_call.1} parent=1 // pred_fallthru
      _
    %948 = vsyncpa [#allocation3], 1
    %949 = vsyncpa [#allocation6], 1
    %950 = vsyncpa [#allocation9], 1
    %951 = vsyncpa [#allocation4], 1

</llo_original>
